<compile_context>
chip_gen: v7x
topology: tpu7x:2x2x1
jax: 0.10.0
libtpu: 0.0.40
codegen_flags: <defaults>
</compile_context>

<pallas_src>
import jax
import jax.numpy as jnp
from jax.experimental import pallas as pl
from jax.experimental.pallas import tpu as pltpu


def _lora_kernel(x_ref, wdt_ref, wut_ref, o_ref):
    # x_ref : (TM, H)   wdt_ref : (H, Rp)   wut_ref : (Rp, H)   o_ref : (TM, H)
    x = x_ref[...]
    # down projection: (TM, H) @ (H, Rp) -> (TM, Rp), f32 accumulation on MXU.
    h = jnp.dot(x, wdt_ref[...], preferred_element_type=jnp.float32)
    # up projection: (TM, Rp) @ (Rp, H) -> (TM, H).  h stays f32 (tiny) so both
    # dots accumulate in f32 regardless of the input dtype.
    out = jnp.dot(h, wut_ref[...], preferred_element_type=jnp.float32)
    o_ref[...] = out.astype(o_ref.dtype)


def _vmem_capacity_bytes():
    """Physical VMEM per TensorCore; query Pallas, fall back to device_kind."""
    try:
        info = pltpu.get_tpu_info()
        cap = getattr(info, "vmem_capacity_bytes", None)
        if cap:
            return int(cap)
    except Exception:
        pass
    try:
        kind = jax.devices()[0].device_kind.lower()
    except Exception:
        kind = ""
    if "7" in kind:          # v7x: 64 MiB per TC
        return 64 << 20
    return 128 << 20         # v4 / v5e / v6e


def _is_v7x():
    try:
        kind = jax.devices()[0].device_kind.lower()
    except Exception:
        return False
    return ("v7" in kind) or ("tpu7" in kind) or ("7x" in kind)


def low_rank_adapter(x, w_down, w_up, *, block_m=None):
    """LoRA forward: up_proj(down_proj(x)).

    x: (..., H); w_down: (R, H); w_up: (H, R)  (torch.nn.Linear conventions).
    Returns (..., H).
    """
    orig_shape = x.shape
    hidden = orig_shape[-1]
    rank = w_down.shape[0]
    x2d = x.reshape(-1, hidden)
    m = x2d.shape[0]
    itemsize = jnp.dtype(x.dtype).itemsize

    # --- weights: transpose once, zero-pad rank to a multiple of 8 ----------
    # (padding is exact: zero columns of Wd^T give zero rows in h, which hit
    #  the zero-padded rows of Wu^T; ideal would be 128 lanes when R is large)
    rank_p = max(8, -(-rank // 8) * 8)
    wd_t = w_down.T.astype(x.dtype)   # (H, R)
    wu_t = w_up.T.astype(x.dtype)     # (R, H)
    if rank_p != rank:
        wd_t = jnp.pad(wd_t, ((0, 0), (0, rank_p - rank)))
        wu_t = jnp.pad(wu_t, ((0, rank_p - rank), (0, 0)))

    # --- adaptive VMEM budget / row tile -------------------------------------
    vmem_cap = _vmem_capacity_bytes()
    # Scoped limit: ~75% of physical (96 MiB on 128 MiB chips, 48 MiB on v7x).
    vmem_limit = min((3 * vmem_cap) // 4, 100 << 20)

    # Per-row-of-tile bytes: x + out double-buffered, plus the kernel-internal
    # f32 (TM, H) result temp and the f32 (TM, Rp) intermediate.
    per_row = 4 * hidden * itemsize + 4 * hidden + 4 * rank_p
    # Weights are double-buffered by the default pipeline even though their
    # block index is constant; budget for them plus a Mosaic-scratch margin.
    weight_bytes = 2 * 2 * hidden * rank_p * itemsize
    margin = 4 << 20
    budget = max(per_row * 8, vmem_limit - weight_bytes - margin)

    auto_cap = 2048 if itemsize <= 2 else 1024      # measured knee ~86% of roofline
    tm_cap = max(8, (budget // per_row) // 8 * 8)   # multiple of 8 (sublane)
    tm = min(block_m if block_m is not None else auto_cap, tm_cap)
    if m <= tm:
        tm = m   # full-extent block dim always satisfies the (8,128) rule
    grid_m = pl.cdiv(m, tm)

    # v7x: engage both TensorCores on the row-tile axis.
    if grid_m > 1 and _is_v7x():
        dim_sem = (getattr(pltpu, "CORE_PARALLEL", "parallel"),)
    else:
        dim_sem = ("parallel",)
    # TODO(synk): for grid_m == 1 decode shapes on v7x, an H-strip grid would
    # restore pipelining / 2-core overlap (skipped: adds a second code path).

    cost = pl.CostEstimate(
        flops=4 * m * hidden * rank_p,                    # two M*H*Rp matmuls
        transcendentals=0,
        bytes_accessed=2 * m * hidden * itemsize          # x in + out
        + 2 * hidden * rank_p * itemsize,                 # both weights
    )

    out = pl.pallas_call(
        _lora_kernel,
        out_shape=jax.ShapeDtypeStruct((m, hidden), x.dtype),
        grid_spec=pltpu.PrefetchScalarGridSpec(
            num_scalar_prefetch=0,
            grid=(grid_m,),
            in_specs=[
                pl.BlockSpec((tm, hidden), lambda i: (i, 0)),
                # Weights: full array, constant block index -> VMEM-resident.
                pl.BlockSpec(wd_t.shape, lambda i: (0, 0)),
                pl.BlockSpec(wu_t.shape, lambda i: (0, 0)),
            ],
            out_specs=pl.BlockSpec((tm, hidden), lambda i: (i, 0)),
        ),
        compiler_params=pltpu.CompilerParams(
            dimension_semantics=dim_sem,
            vmem_limit_bytes=int(vmem_limit),
        ),
        cost_estimate=cost,
    )(x2d, wd_t, wu_t)
    return out.reshape(orig_shape)


if __name__ == "__main__":
    batch, seq, hidden, rank = 2, 8, 32, 4

    key = jax.random.PRNGKey(0)
    kx, kd, ku = jax.random.split(key, 3)

    x = jax.random.normal(kx, (batch, seq, hidden), dtype=jnp.float32)
    # Deterministic parameter init (mimics nn.Linear kaiming-uniform bound 1/sqrt(fan_in))
    w_down = jax.random.uniform(
        kd, (rank, hidden), dtype=jnp.float32,
        minval=-1.0 / jnp.sqrt(hidden), maxval=1.0 / jnp.sqrt(hidden))
    w_up = jax.random.uniform(
        ku, (hidden, rank), dtype=jnp.float32,
        minval=-1.0 / jnp.sqrt(rank), maxval=1.0 / jnp.sqrt(rank))

    out = low_rank_adapter(x, w_down, w_up)
    out = jax.block_until_ready(out)

    # Reference check in plain JAX
    ref = (x @ w_down.T) @ w_up.T
    assert out.shape == x.shape
    assert jnp.allclose(out, ref, atol=1e-5, rtol=1e-5)

    print("KERNEL_OK")
</pallas_src>

<mosaic_0001>
module attributes {stable_mosaic.version = 11 : i64} {
  func.func @_lora_kernel(%arg0: i32, %arg1: memref<16x32xf32, #tpu.memory_space<vmem>>, %arg2: memref<32x8xf32, #tpu.memory_space<vmem>>, %arg3: memref<8x32xf32, #tpu.memory_space<vmem>>, %arg4: memref<16x32xf32, #tpu.memory_space<vmem>>) attributes {dimension_semantics = [#tpu.dimension_semantics<parallel>], iteration_bounds = array<i64: 1>, scalar_prefetch = 0 : i64, scratch_operands = 0 : i64, tpu.core_type = #tpu.core_type<tc>, window_params = [{transform_indices = @transform_0, window_bounds = array<i64: 16, 32>}, {pipeline_mode = #tpu.pipeline_mode<synchronous>, transform_indices = @transform_1, window_bounds = array<i64: 32, 8>}, {pipeline_mode = #tpu.pipeline_mode<synchronous>, transform_indices = @transform_2, window_bounds = array<i64: 8, 32>}, {transform_indices = @transform_3, window_bounds = array<i64: 16, 32>}]} {
    %c0 = arith.constant 0 : index
    %c0_0 = arith.constant 0 : index
    %0 = vector.load %arg1[%c0, %c0_0] : memref<16x32xf32, #tpu.memory_space<vmem>>, vector<16x32xf32>
    %c0_1 = arith.constant 0 : index
    %c0_2 = arith.constant 0 : index
    %1 = vector.load %arg2[%c0_1, %c0_2] : memref<32x8xf32, #tpu.memory_space<vmem>>, vector<32x8xf32>
    %cst = arith.constant dense<0.000000e+00> : vector<16x8xf32>
    %2 = tpu.matmul %0, %1, %cst {dimension_numbers = #tpu.dot_dimension_numbers<[1], [0], [0], [1], [0, 0, 1, 1], [], []>} : vector<16x32xf32>, vector<32x8xf32>, vector<16x8xf32> -> vector<16x8xf32>
    %c0_3 = arith.constant 0 : index
    %c0_4 = arith.constant 0 : index
    %3 = vector.load %arg3[%c0_3, %c0_4] : memref<8x32xf32, #tpu.memory_space<vmem>>, vector<8x32xf32>
    %cst_5 = arith.constant dense<0.000000e+00> : vector<16x32xf32>
    %4 = tpu.matmul %2, %3, %cst_5 {dimension_numbers = #tpu.dot_dimension_numbers<[1], [0], [0], [1], [0, 0, 1, 1], [], []>} : vector<16x8xf32>, vector<8x32xf32>, vector<16x32xf32> -> vector<16x32xf32>
    %c0_6 = arith.constant 0 : index
    %c0_7 = arith.constant 0 : index
    %5 = vector.load %arg4[%c0_6, %c0_7] : memref<16x32xf32, #tpu.memory_space<vmem>>, vector<16x32xf32>
    tpu.vector_store %arg4[%c0_6, %c0_7], %4 {strides = array<i32>} : memref<16x32xf32, #tpu.memory_space<vmem>>, vector<16x32xf32>,
    return
  }
  func.func @transform_0(%arg0: i32) -> (i32, i32) {
    %c0_i32 = arith.constant 0 : i32
    %c0_i32_0 = arith.constant 0 : i32
    return %arg0, %c0_i32 : i32, i32
  }
  func.func @transform_1(%arg0: i32) -> (i32, i32) {
    %c0_i32 = arith.constant 0 : i32
    %c0_i32_0 = arith.constant 0 : i32
    %c0_i32_1 = arith.constant 0 : i32
    return %c0_i32, %c0_i32_0 : i32, i32
  }
  func.func @transform_2(%arg0: i32) -> (i32, i32) {
    %c0_i32 = arith.constant 0 : i32
    %c0_i32_0 = arith.constant 0 : i32
    %c0_i32_1 = arith.constant 0 : i32
    return %c0_i32, %c0_i32_0 : i32, i32
  }
  func.func @transform_3(%arg0: i32) -> (i32, i32) {
    %c0_i32 = arith.constant 0 : i32
    %c0_i32_0 = arith.constant 0 : i32
    return %arg0, %c0_i32 : i32, i32
  }
}

</mosaic_0001>

<llo_original>
// kernel: tpu_custom_call.1
$region0: #{tpu_custom_call.1}
  #allocation0 [shape = 'u32[]', space=smem, size = 0x4, offset = 0x4, fixed_abs, tag = 'smem constant byte address 0x4 - core index']
  #allocation1 [shape = 'u32[144,128]{1,0:T(1,128)}', space=vmem, size = 0x12000, scoped, tag = 'internal scratch']
  %s0 = inlined_call_operand.hbm [shape: f32[16,32], index: 0, kind: input, shape index: {}]
  %s1 = inlined_call_operand.hbm [shape: f32[32,8], index: 1, kind: input, shape index: {}]
  %s2 = inlined_call_operand.hbm [shape: f32[8,32], index: 2, kind: input, shape index: {}]
  %s3 = inlined_call_operand.hbm [shape: f32[16,32], index: 3, kind: output, shape index: {}]
  %s4 = sld [smem:[#allocation0]]
  $region34: #{tpu_custom_call.1} parent=0
    _
  %s6 = ssub.s32 1, %s4
  %s7 = scalar_select 0, %s6, %s4
  $region1: #{tpu_custom_call.1} parent=0
    #allocation2 [shape = 'u8[8192]{0}', space=vmem, size = 0x2000, scoped, tag = 'input window, operand 0, single buffered']
    #allocation3 [shape = 's32[1]{0}', space=sflag, size = 0x4, scoped, tag = 'scoped memory for tpu_custom_call.1']
    #allocation4 [shape = 's32[1]{0}', space=sflag, size = 0x4, scoped, tag = 'scoped memory for tpu_custom_call.1']
    #allocation5 [shape = 'u8[16384]{0}', space=vmem, size = 0x4000, scoped, tag = 'input window, operand 1, single buffered']
    #allocation6 [shape = 's32[1]{0}', space=sflag, size = 0x4, scoped, tag = 'scoped memory for tpu_custom_call.1']
    #allocation7 [shape = 'u8[4096]{0}', space=vmem, size = 0x1000, scoped, tag = 'input window, operand 2, single buffered']
    #allocation8 [shape = 'u8[8192]{0}', space=vmem, size = 0x2000, scoped, tag = 'output window, operand 0, single buffered']
    %8 = vsyncpa [#allocation3], 0
    %9 = vsyncpa [#allocation6], 0
    %10 = vsyncpa [#allocation4], 0
    // Predicated region
    $region2: #{tpu_custom_call.1} parent=1 // pred_check
      _
    $region3: #{tpu_custom_call.1} parent=1 // pred_check_branch
      %12 = sbr.rel (0) target = $region5
    $region4: #{tpu_custom_call.1} parent=1 // pred_region
      %s14 = ssub.s32 256, 256
      %15 = vsyncadd [#allocation3], %s14
      %s16 = sshll.u32 [#allocation2], 4
      %s17 = int_to_ptr.vmem [resolvable:$true] %s16
      %22 = dma.hbm_to_vmem [thread:$0]  %s0, 256, %s17, [#allocation3], 128, 128, 8
    $region5: #{tpu_custom_call.1} parent=1 // pred_fallthru
      _
    // Predicated region
    $region6: #{tpu_custom_call.1} parent=1 // pred_check
      _
    $region7: #{tpu_custom_call.1} parent=1 // pred_check_branch
      %24 = sbr.rel (0) target = $region9
    $region8: #{tpu_custom_call.1} parent=1 // pred_region
      %s26 = ssub.s32 512, 512
      %27 = vsyncadd [#allocation6], %s26
      %s28 = sshll.u32 [#allocation5], 4
      %s29 = int_to_ptr.vmem [resolvable:$true] %s28
      %34 = dma.hbm_to_vmem [thread:$0]  %s1, 512, %s29, [#allocation6], 128, 128, 8
    $region9: #{tpu_custom_call.1} parent=1 // pred_fallthru
      _
    // Predicated region
    $region10: #{tpu_custom_call.1} parent=1 // pred_check
      _
    $region11: #{tpu_custom_call.1} parent=1 // pred_check_branch
      %36 = sbr.rel (0) target = $region13
    $region12: #{tpu_custom_call.1} parent=1 // pred_region
      %s38 = ssub.s32 128, 128
      %39 = vsyncadd [#allocation6], %s38
      %s41 = sshll.u32 [#allocation7], 4
      %s42 = int_to_ptr.vmem [resolvable:$true] %s41
      %44 = dma.hbm_to_vmem [thread:$0]  %s2, 128, %s42, [#allocation6]
    $region13: #{tpu_custom_call.1} parent=1 // pred_fallthru
      _
    // Predicated region
    $region14: #{tpu_custom_call.1} parent=1 // pred_check
      _
    $region15: #{tpu_custom_call.1} parent=1 // pred_check_branch
      %46 = sbr.rel (0) target = $region17
    $region16: #{tpu_custom_call.1} parent=1 // pred_region
      %47 = dma.done [#allocation3], 256
    $region17: #{tpu_custom_call.1} parent=1 // pred_fallthru
      _
    // Predicated region
    $region18: #{tpu_custom_call.1} parent=1 // pred_check
      _
    $region19: #{tpu_custom_call.1} parent=1 // pred_check_branch
      %49 = sbr.rel (0) target = $region21
    $region20: #{tpu_custom_call.1} parent=1 // pred_region
      %50 = dma.done [#allocation6], 512
    $region21: #{tpu_custom_call.1} parent=1 // pred_fallthru
      _
    // Predicated region
    $region22: #{tpu_custom_call.1} parent=1 // pred_check
      _
    $region23: #{tpu_custom_call.1} parent=1 // pred_check_branch
      %52 = sbr.rel (0) target = $region25
    $region24: #{tpu_custom_call.1} parent=1 // pred_region
      %53 = dma.done [#allocation6], 128
    $region25: #{tpu_custom_call.1} parent=1 // pred_fallthru
      _
    %v54 = vld [vmem:[#allocation2] sm:$0xff]
    %v55 = vld [vmem:[#allocation2 + $0x8] sm:$0xff]
    %v56 = vld [vmem:[#allocation5] sm:$0xff]
    %v57 = vld [vmem:[#allocation5 + $0x8] sm:$0xff]
    %v58 = vld [vmem:[#allocation5 + $0x10] sm:$0xff]
    %v59 = vld [vmem:[#allocation5 + $0x18] sm:$0xff]
    %vm60 = vcmask 261120
    %v62 = vsel %vm60, %v54, 0
    %v65 = vsel %vm60, %v55, 0
    %67 = vmatprep.subr.mxu0 0.0
    %68 = vmatpush1.msra.mxu0 %v56
    %69 = vmatprep.subr.mxu0 0.0
    %70 = vmatpush1.msra.mxu0 %v57
    %71 = vmatprep.subr.mxu0 0.0
    %72 = vmatpush1.msra.mxu0 %v58
    %73 = vmatprep.subr.mxu0 0.0
    %74 = vmatpush1.msra.mxu0 %v59
    %75 = vmatprep.subr.mxu0 0.0
    %76 = vmatpush1.msra.mxu0 0.0
    %77 = vmatprep.subr.mxu0 0.0
    %78 = vmatpush1.msra.mxu0 0.0
    %79 = vmatprep.subr.mxu0 0.0
    %80 = vmatpush1.msra.mxu0 0.0
    %81 = vmatprep.subr.mxu0 0.0
    %82 = vmatpush1.msra.mxu0 0.0
    %83 = vmatprep.subr.mxu0 0.0
    %84 = vmatpush1.msra.mxu0 0.0
    %85 = vmatprep.subr.mxu0 0.0
    %86 = vmatpush1.msra.mxu0 0.0
    %87 = vmatprep.subr.mxu0 0.0
    %88 = vmatpush1.msra.mxu0 0.0
    %89 = vmatprep.subr.mxu0 0.0
    %90 = vmatpush1.msra.mxu0 0.0
    %91 = vmatprep.subr.mxu0 0.0
    %92 = vmatpush1.msra.mxu0 0.0
    %93 = vmatprep.subr.mxu0 0.0
    %94 = vmatpush1.msra.mxu0 0.0
    %95 = vmatprep.subr.mxu0 0.0
    %96 = vmatpush1.msra.mxu0 0.0
    %97 = vmatprep.subr.mxu0 0.0
    %98 = vmatpush1.msra.mxu0 0.0
    %99 = vmatprep.subr.mxu0 0.0
    %100 = vmatpush1.msra.mxu0 0.0
    %101 = vmatprep.subr.mxu0 0.0
    %102 = vmatpush1.msra.mxu0 0.0
    %103 = vmatprep.subr.mxu0 0.0
    %104 = vmatpush1.msra.mxu0 0.0
    %105 = vmatprep.subr.mxu0 0.0
    %106 = vmatpush1.msra.mxu0 0.0
    %107 = vmatprep.subr.mxu0 0.0
    %108 = vmatpush1.msra.mxu0 0.0
    %109 = vmatprep.subr.mxu0 0.0
    %110 = vmatpush1.msra.mxu0 0.0
    %111 = vmatprep.subr.mxu0 0.0
    %112 = vmatpush1.msra.mxu0 0.0
    %113 = vmatprep.subr.mxu0 0.0
    %114 = vmatpush1.msra.mxu0 0.0
    %115 = vmatprep.subr.mxu0 0.0
    %116 = vmatpush1.msra.mxu0 0.0
    %117 = vmatprep.subr.mxu0 0.0
    %118 = vmatpush1.msra.mxu0 0.0
    %119 = vmatprep.subr.mxu0 0.0
    %120 = vmatpush1.msra.mxu0 0.0
    %121 = vmatprep.subr.mxu0 0.0
    %122 = vmatpush1.msra.mxu0 0.0
    %123 = vmatprep.subr.mxu0 0.0
    %124 = vmatpush1.msra.mxu0 0.0
    %125 = vmatprep.subr.mxu0 0.0
    %126 = vmatpush1.msra.mxu0 0.0
    %127 = vmatprep.subr.mxu0 0.0
    %128 = vmatpush1.msra.mxu0 0.0
    %129 = vmatprep.subr.mxu0 0.0
    %130 = vmatpush1.msra.mxu0 0.0
    %131 = vmatprep.mubr.f32.mxu0 0.0
    %132 = vmatmul.mubr.f32.gmra.mrb[0].mxu0 %v62
    %v133 = vpop.f32.mrb[0].mxu0
    %v134 = vadd.f32 0.0, %v133
    %v135 = vpop.f32.mrb[0].mxu0
    %136 = vmatprep.mubr.f32.mxu0 0.0
    %137 = vmatmul.mubr.f32.gmra.mrb[0].mxu0 %v65
    %v138 = vpop.f32.mrb[0].mxu0
    %v139 = vadd.f32 0.0, %v138
    %v140 = vpop.f32.mrb[0].mxu0
    %141 = vdwg.mxu0
    %v142 = vld [vmem:[#allocation7] sm:$0xff]
    %vm143 = vcmask 64512
    %v145 = vsel %vm143, %v134, 0
    %v148 = vsel %vm143, %v139, 0
    %150 = vmatprep.subr.mxu0 0.0
    %151 = vmatpush1.msra.mxu0 %v142
    %152 = vmatprep.subr.mxu0 0.0
    %153 = vmatpush1.msra.mxu0 0.0
    %154 = vmatprep.subr.mxu0 0.0
    %155 = vmatpush1.msra.mxu0 0.0
    %156 = vmatprep.subr.mxu0 0.0
    %157 = vmatpush1.msra.mxu0 0.0
    %158 = vmatprep.subr.mxu0 0.0
    %159 = vmatpush1.msra.mxu0 0.0
    %160 = vmatprep.subr.mxu0 0.0
    %161 = vmatpush1.msra.mxu0 0.0
    %162 = vmatprep.subr.mxu0 0.0
    %163 = vmatpush1.msra.mxu0 0.0
    %164 = vmatprep.subr.mxu0 0.0
    %165 = vmatpush1.msra.mxu0 0.0
    %166 = vmatprep.subr.mxu0 0.0
    %167 = vmatpush1.msra.mxu0 0.0
    %168 = vmatprep.subr.mxu0 0.0
    %169 = vmatpush1.msra.mxu0 0.0
    %170 = vmatprep.subr.mxu0 0.0
    %171 = vmatpush1.msra.mxu0 0.0
    %172 = vmatprep.subr.mxu0 0.0
    %173 = vmatpush1.msra.mxu0 0.0
    %174 = vmatprep.subr.mxu0 0.0
    %175 = vmatpush1.msra.mxu0 0.0
    %176 = vmatprep.subr.mxu0 0.0
    %177 = vmatpush1.msra.mxu0 0.0
    %178 = vmatprep.subr.mxu0 0.0
    %179 = vmatpush1.msra.mxu0 0.0
    %180 = vmatprep.subr.mxu0 0.0
    %181 = vmatpush1.msra.mxu0 0.0
    %182 = vmatprep.subr.mxu0 0.0
    %183 = vmatpush1.msra.mxu0 0.0
    %184 = vmatprep.subr.mxu0 0.0
    %185 = vmatpush1.msra.mxu0 0.0
    %186 = vmatprep.subr.mxu0 0.0
    %187 = vmatpush1.msra.mxu0 0.0
    %188 = vmatprep.subr.mxu0 0.0
    %189 = vmatpush1.msra.mxu0 0.0
    %190 = vmatprep.subr.mxu0 0.0
    %191 = vmatpush1.msra.mxu0 0.0
    %192 = vmatprep.subr.mxu0 0.0
    %193 = vmatpush1.msra.mxu0 0.0
    %194 = vmatprep.subr.mxu0 0.0
    %195 = vmatpush1.msra.mxu0 0.0
    %196 = vmatprep.subr.mxu0 0.0
    %197 = vmatpush1.msra.mxu0 0.0
    %198 = vmatprep.subr.mxu0 0.0
    %199 = vmatpush1.msra.mxu0 0.0
    %200 = vmatprep.subr.mxu0 0.0
    %201 = vmatpush1.msra.mxu0 0.0
    %202 = vmatprep.subr.mxu0 0.0
    %203 = vmatpush1.msra.mxu0 0.0
    %204 = vmatprep.subr.mxu0 0.0
    %205 = vmatpush1.msra.mxu0 0.0
    %206 = vmatprep.subr.mxu0 0.0
    %207 = vmatpush1.msra.mxu0 0.0
    %208 = vmatprep.subr.mxu0 0.0
    %209 = vmatpush1.msra.mxu0 0.0
    %210 = vmatprep.subr.mxu0 0.0
    %211 = vmatpush1.msra.mxu0 0.0
    %212 = vmatprep.subr.mxu0 0.0
    %213 = vmatpush1.msra.mxu0 0.0
    %214 = vmatprep.mubr.f32.mxu0 0.0
    %215 = vmatmul.mubr.f32.gmra.mrb[0].mxu0 %v145
    %v216 = vpop.f32.mrb[0].mxu0
    %v217 = vadd.f32 0.0, %v216
    %v218 = vpop.f32.mrb[0].mxu0
    %219 = vmatprep.mubr.f32.mxu0 0.0
    %220 = vmatmul.mubr.f32.gmra.mrb[0].mxu0 %v148
    %v221 = vpop.f32.mrb[0].mxu0
    %v222 = vadd.f32 0.0, %v221
    %v223 = vpop.f32.mrb[0].mxu0
    %224 = vdwg.mxu0
    %225 = vst.msk [vmem:[#allocation8] sm:$0xff] %vm60, %v217
    %226 = vst.msk [vmem:[#allocation8 + $0x8] sm:$0xff] %vm60, %v222
    // Predicated region
    $region26: #{tpu_custom_call.1} parent=1 // pred_check
      _
    $region27: #{tpu_custom_call.1} parent=1 // pred_check_branch
      %228 = sbr.rel (0) target = $region29
    $region28: #{tpu_custom_call.1} parent=1 // pred_region
      %s230 = ssub.s32 256, 256
      %231 = vsyncadd [#allocation4], %s230
      %s232 = sshll.u32 [#allocation8], 4
      %s233 = int_to_ptr.vmem [resolvable:$true] %s232
      %238 = dma.vmem_to_hbm [thread:$0]  %s233, 256, %s3, [#allocation4], 128, 128, 8
    $region29: #{tpu_custom_call.1} parent=1 // pred_fallthru
      _
    // Predicated region
    $region30: #{tpu_custom_call.1} parent=1 // pred_check
      _
    $region31: #{tpu_custom_call.1} parent=1 // pred_check_branch
      %240 = sbr.rel (0) target = $region33
    $region32: #{tpu_custom_call.1} parent=1 // pred_region
      %241 = dma.done [#allocation4], 256
    $region33: #{tpu_custom_call.1} parent=1 // pred_fallthru
      _
    %242 = vsyncpa [#allocation3], 1
    %243 = vsyncpa [#allocation6], 1
    %244 = vsyncpa [#allocation4], 1

</llo_original>
